<compile_context>
chip_gen: v7x
topology: tpu7x:2x2x1
jax: 0.10.0
libtpu: 0.0.40
codegen_flags: <defaults>
</compile_context>

<pallas_src>
import math

import jax
import jax.numpy as jnp
from jax.experimental import pallas as pl
from jax.experimental.pallas import tpu as pltpu


# Deeper input buffering for large K on 128-MiB-VMEM parts (v5e/v6e only).
_TRIPLE_BUFFER_INPUTS = True


# ----------------------------- Pallas kernels --------------------------------


def _affine_mix_kernel(scal_ref, *refs):
    """out = sum_k scal[k] * x_k + scal[K]  (f32 accumulation, native-dtype IO)."""
    # scal_ref: SMEM (K+1,) f32 scalar-prefetch array (K scales + 1 bias)
    # refs[:-1]: K VMEM tiles (tm, L), native dtype
    # refs[-1]:  VMEM output tile (tm, L)
    o_ref = refs[-1]
    K = len(refs) - 1
    acc = scal_ref[0] * refs[0][...].astype(jnp.float32)
    for k in range(1, K):
        acc = acc + scal_ref[k] * refs[k][...].astype(jnp.float32)
    o_ref[...] = (acc + scal_ref[K]).astype(o_ref.dtype)


def _masked_stats_kernel(mask_ref, *refs):
    """Per-grid-step partial masked sums: rows 2k -> sum(x*m), rows 2k+1 -> sum(x*m*x)."""
    # mask_ref: (tm, 1) f32; refs[:-1]: K tensors (tm, D); refs[-1]: (2K, D) f32 partials
    o_ref = refs[-1]
    K = len(refs) - 1
    m = mask_ref[...]
    for k in range(K):
        x = refs[k][...].astype(jnp.float32)
        xm = x * m
        o_ref[2 * k: 2 * k + 1, :] = jnp.sum(xm, axis=0, keepdims=True)
        o_ref[2 * k + 1: 2 * k + 2, :] = jnp.sum(xm * x, axis=0, keepdims=True)


# ----------------------------- tiling helpers --------------------------------


def _vmem_budget():
    """(physical VMEM, vmem_limit_bytes, byte budget for pipelined tile buffers)."""
    try:
        phys = int(pltpu.get_tpu_info().vmem_capacity_bytes)
    except Exception:
        phys = 64 * 1024 * 1024  # conservative: v7x per-TensorCore VMEM
    # v7x (64 MiB): keep ~16 MiB headroom for Mosaic scratch / DMA bookkeeping.
    # v5e/v6e (128 MiB): cap at 100 MiB as before.
    limit = max(16 * 1024 * 1024, min(phys - 16 * 1024 * 1024, 100 * 1024 * 1024))
    budget = int(limit * 0.8)
    return phys, limit, budget


def _sublane_mult(dtype):
    """Row-tile granularity: 8 for f32, 16 for bf16, 32 for 1-byte dtypes."""
    itemsize = jnp.dtype(dtype).itemsize
    return 8 * max(1, 4 // max(1, itemsize))


def _choose_layout(total, sublane_mult=8):
    """Pick a lane-dense (rows, L) flattening; pad to a 1024 multiple if ragged."""
    for m in (sublane_mult, 8, 1):
        for L in (512, 256, 128):
            if total % L == 0 and (total // L) % m == 0:
                return total // L, L, 0
    # Ragged total: pad to a multiple of 8x128 so output stores stay lane-dense.
    padded = -(-total // 1024) * 1024
    return padded // 128, 128, padded - total


def _pick_tile_rows(R, row_bytes, buf_budget, sublane_mult=8,
                    target_steps=8, min_rows=512):
    """Largest row tile that fits VMEM while leaving >= ~target_steps grid steps."""
    cap = max(8, buf_budget // max(1, row_bytes))          # VMEM-capacity cap
    cap = min(cap, 4096)                                    # no roofline gain past ~1-2K rows
    cap = min(cap, max(min_rows, -(-R // target_steps)))    # keep >= ~8 steps for pipelining
    cap = min(cap, R)
    for mult in (sublane_mult, 8):
        divs = [t for t in range(mult, cap + 1, mult) if R % t == 0]
        if divs:
            best = max(divs)
            # Prefer an even grid-step count (v7x megacore balance) if it does
            # not shrink the tile by more than 2x.
            even = [t for t in divs if (R // t) % 2 == 0]
            if even and 2 * max(even) >= best:
                best = max(even)
            return best
    # TODO(synk): row counts not divisible by 8 fall back to a single full block
    # (no pipelining); only hit for tiny / pathologically factored shapes.
    return R


# ------------------------------ kernel wrappers -------------------------------


def _affine_mix_pallas(tensors, scales, bias, out_dtype=None):
    """out = reshape( sum_k scales[k] * tensors[k] + bias )."""
    K = len(tensors)
    shape = tensors[0].shape
    in_dtype = tensors[0].dtype
    out_dtype = in_dtype if out_dtype is None else out_dtype
    in_bytes = jnp.dtype(in_dtype).itemsize
    out_bytes = jnp.dtype(out_dtype).itemsize
    mult = _sublane_mult(in_dtype)

    total = math.prod(shape)
    R, L, pad = _choose_layout(total, mult)
    if pad:
        # TODO(synk): padding materialises a copy of each input; only hit when
        # the flattened size is not a multiple of 128 (keeps stores lane-dense).
        flats = [jnp.pad(t.reshape(-1), (0, pad)).reshape(R, L) for t in tensors]
    else:
        flats = [t.reshape(R, L) for t in tensors]

    phys, vmem_limit, budget = _vmem_budget()
    in_bufs = 3 if (_TRIPLE_BUFFER_INPUTS and K >= 8
                    and phys >= 112 * 1024 * 1024) else 2
    row_bytes = L * (K * in_bytes * in_bufs + out_bytes * 2)
    tm = _pick_tile_rows(R, row_bytes, budget, sublane_mult=mult)
    grid = (max(1, R // tm),)

    scalars = jnp.concatenate([
        jnp.asarray(scales, jnp.float32).reshape(K),
        jnp.asarray(bias, jnp.float32).reshape(1),
    ]).astype(jnp.float32)                                   # (K+1,)

    idx = lambda i, s: (i, 0)                                # s = scalar-prefetch ref
    in_tile = pl.BlockSpec((tm, L), idx)
    if in_bufs == 3:
        try:
            in_tile = pl.BlockSpec((tm, L), idx, pipeline_mode=pl.Buffered(3))
        except TypeError:
            in_tile = pl.BlockSpec((tm, L), idx)
    out_tile = pl.BlockSpec((tm, L), idx)

    cost = pl.CostEstimate(
        flops=2 * K * total,
        transcendentals=0,
        bytes_accessed=total * (K * in_bytes + out_bytes),
    )

    out = pl.pallas_call(
        _affine_mix_kernel,
        grid_spec=pltpu.PrefetchScalarGridSpec(
            num_scalar_prefetch=1,
            grid=grid,
            in_specs=[in_tile] * K,
            out_specs=out_tile,
        ),
        out_shape=jax.ShapeDtypeStruct((R, L), out_dtype),
        compiler_params=pltpu.CompilerParams(
            dimension_semantics=("parallel",),
            vmem_limit_bytes=int(vmem_limit),
        ),
        cost_estimate=cost,
    )(scalars, *flats)

    if pad:
        return out.reshape(-1)[:total].reshape(shape)
    return out.reshape(shape)


def _masked_stats_pallas(tensors, mask_f32):
    """One fused tiled pass over all K tensors + mask -> per-tensor (s1, s2)."""
    K = len(tensors)
    shape = tensors[0].shape
    D = shape[-1]
    rows = math.prod(shape[:-1])
    in_dtype = tensors[0].dtype
    in_bytes = jnp.dtype(in_dtype).itemsize
    mult = _sublane_mult(in_dtype)

    flats = [t.reshape(rows, D) for t in tensors]
    m2 = mask_f32.reshape(rows, 1)

    phys, vmem_limit, budget = _vmem_budget()
    out_fixed = 2 * K * D * 4 * 2                   # per-step partial-output buffers
    row_bytes = 2 * (K * in_bytes * D + 4)          # double-buffered K inputs + mask
    tm = _pick_tile_rows(rows, row_bytes, max(8 * row_bytes, budget - out_fixed),
                         sublane_mult=mult)
    steps = max(1, rows // tm)

    partial = pl.pallas_call(
        _masked_stats_kernel,
        grid=(steps,),
        in_specs=[pl.BlockSpec((tm, 1), lambda i: (i, 0))]
                 + [pl.BlockSpec((tm, D), lambda i: (i, 0))] * K,
        out_specs=pl.BlockSpec((None, 2 * K, D), lambda i: (i, 0, 0)),
        out_shape=jax.ShapeDtypeStruct((steps, 2 * K, D), jnp.float32),
        compiler_params=pltpu.CompilerParams(
            dimension_semantics=("parallel",),
            vmem_limit_bytes=int(vmem_limit),
        ),
    )(m2, *flats)

    ps = jnp.sum(partial, axis=0)                   # (2K, D): tiny XLA finish
    s1 = jnp.sum(ps[0::2], axis=-1)                 # (K,) sum(x * m)
    s2 = jnp.sum(ps[1::2], axis=-1)                 # (K,) sum(x * m * x)
    return s1, s2


# ------------------------------ module wrapper -------------------------------


class ScalarMixPallas:
    """JAX/Pallas port of machamp's ScalarMix module (forward pass)."""

    def __init__(self, mixture_size, do_layer_norm=False,
                 initial_scalar_parameters=None, trainable=True):
        if initial_scalar_parameters is None:
            initial_scalar_parameters = [0.0] * mixture_size
        assert len(initial_scalar_parameters) == mixture_size
        self.mixture_size = mixture_size
        self.do_layer_norm = do_layer_norm
        self.scalar_parameters = jnp.asarray(initial_scalar_parameters, jnp.float32)  # (K,)
        self.gamma = jnp.asarray([1.0], jnp.float32)                                  # (1,)

    def __call__(self, tensors, mask=None):
        K = self.mixture_size
        assert len(tensors) == K, "wrong number of tensors passed to ScalarMix"
        w = jax.nn.softmax(self.scalar_parameters)   # tiny K-way softmax: plain JAX
        gamma = self.gamma[0]

        if not self.do_layer_norm:
            return _affine_mix_pallas(tensors, gamma * w, jnp.zeros((1,), jnp.float32))

        assert mask is not None, "mask is required when do_layer_norm=True"
        D = tensors[0].shape[-1]
        mf = mask.astype(jnp.float32)
        n = jnp.sum(mf) * D   # NOTE: an all-masked input yields NaN, same as the reference

        # Fused tiled stats pass: one streaming read of all K tensors + mask.
        s1, s2 = _masked_stats_pallas(tensors, mf)
        mean = s1 / n
        var = jnp.maximum(s2 / n - mean * mean, 0.0)   # clamp one-pass variance (fp safety)
        inv = jax.lax.rsqrt(var + 1e-13)
        scales = gamma * w * inv                        # (K,)
        bias = -jnp.sum(scales * mean)                  # scalar
        # TODO(synk): when K * total bytes fits in ~half of VMEM, a fully fused
        # single-HBM-read (stats + mix) kernel would halve input traffic; the
        # current LN path still reads the tensors twice (stats pass + mix pass).
        return _affine_mix_pallas(tensors, scales, bias)


# ------------------------------ pure-JAX reference ---------------------------


def scalar_mix_ref(scalar_parameters, gamma, tensors, do_layer_norm=False, mask=None):
    w = jax.nn.softmax(scalar_parameters)
    if not do_layer_norm:
        out = 0.0
        for k, t in enumerate(tensors):
            out = out + w[k] * t.astype(jnp.float32)
        return gamma[0] * out
    bm = mask[..., None].astype(jnp.float32)
    D = tensors[0].shape[-1]
    n = jnp.sum(mask.astype(jnp.float32)) * D
    out = 0.0
    for k, t in enumerate(tensors):
        x = t.astype(jnp.float32)
        xm = x * bm
        mean = jnp.sum(xm) / n
        var = jnp.sum(((xm - mean) * bm) ** 2) / n
        out = out + w[k] * (x - mean) / jnp.sqrt(var + 1e-13)
    return gamma[0] * out


# ----------------------------------- main ------------------------------------


if __name__ == "__main__":
    key = jax.random.PRNGKey(0)
    keys = jax.random.split(key, 64)
    ki = iter(range(64))

    K, B, T, D = 4, 2, 8, 32
    tensors = [jax.random.normal(keys[next(ki)], (B, T, D), jnp.float32) for _ in range(K)]
    mask = jax.random.bernoulli(keys[next(ki)], p=0.75, shape=(B, T))
    mask = mask.at[:, 0].set(True)   # guarantee at least one unmasked position

    init_w = [0.1, -0.2, 0.3, 0.05]

    # 1) no layer norm, small f32
    mix = ScalarMixPallas(K, do_layer_norm=False, initial_scalar_parameters=init_w)
    out = jax.block_until_ready(mix(tensors))
    ref = scalar_mix_ref(mix.scalar_parameters, mix.gamma, tensors)
    assert out.shape == (B, T, D) and out.dtype == jnp.float32
    assert jnp.allclose(out, ref, atol=1e-5, rtol=1e-5), "mismatch (no layer norm)"

    # 2) layer norm, small f32 (fused Pallas stats pass + affine mix)
    mix_ln = ScalarMixPallas(K, do_layer_norm=True, initial_scalar_parameters=init_w)
    out_ln = jax.block_until_ready(mix_ln(tensors, mask=mask))
    ref_ln = scalar_mix_ref(mix_ln.scalar_parameters, mix_ln.gamma, tensors,
                            do_layer_norm=True, mask=mask)
    assert out_ln.shape == (B, T, D)
    assert jnp.allclose(out_ln, ref_ln, atol=1e-3, rtol=1e-3), "mismatch (layer norm)"

    # 3) larger f32 shape -> multi-step lane-dense grid, no LN
    B2, T2, D2 = 4, 64, 256
    big = [jax.random.normal(keys[next(ki)], (B2, T2, D2), jnp.float32) for _ in range(K)]
    out_big = jax.block_until_ready(mix(big))
    ref_big = scalar_mix_ref(mix.scalar_parameters, mix.gamma, big)
    assert out_big.shape == (B2, T2, D2)
    assert jnp.allclose(out_big, ref_big, atol=1e-5, rtol=1e-5), "mismatch (big, no LN)"

    # 4) bf16 inputs: native-dtype reads, bf16 output (f32 accumulation inside)
    big_bf16 = [t.astype(jnp.bfloat16) for t in big]
    out_bf = jax.block_until_ready(mix(big_bf16))
    assert out_bf.dtype == jnp.bfloat16
    ref_bf = scalar_mix_ref(mix.scalar_parameters, mix.gamma, big_bf16)
    assert jnp.allclose(out_bf.astype(jnp.float32), ref_bf, atol=3e-2, rtol=3e-2), \
        "mismatch (bf16, no LN)"

    # 5) layer norm on the larger shape (multi-step stats grid)
    mask2 = jax.random.bernoulli(keys[next(ki)], p=0.9, shape=(B2, T2))
    mask2 = mask2.at[:, 0].set(True)
    out_big_ln = jax.block_until_ready(mix_ln(big, mask=mask2))
    ref_big_ln = scalar_mix_ref(mix_ln.scalar_parameters, mix_ln.gamma, big,
                                do_layer_norm=True, mask=mask2)
    assert jnp.allclose(out_big_ln, ref_big_ln, atol=1e-3, rtol=1e-3), \
        "mismatch (big, layer norm)"

    # 6) ragged total (not a multiple of 128): exercises the lane-dense padding path
    rag = [jax.random.normal(keys[next(ki)], (2, 7, 30), jnp.float32) for _ in range(K)]
    out_rag = jax.block_until_ready(mix(rag))
    ref_rag = scalar_mix_ref(mix.scalar_parameters, mix.gamma, rag)
    assert out_rag.shape == (2, 7, 30)
    assert jnp.allclose(out_rag, ref_rag, atol=1e-5, rtol=1e-5), "mismatch (ragged)"

    # 7) many layers (K=13) in bf16: exercises the triple-buffered input path on
    #    128-MiB-VMEM parts (v5e/v6e); double-buffered elsewhere.
    K13 = 13
    t13 = [jax.random.normal(keys[next(ki)], (4, 128, 256), jnp.bfloat16)
           for _ in range(K13)]
    mix13 = ScalarMixPallas(K13, do_layer_norm=False)
    try:
        out13 = jax.block_until_ready(mix13(t13))
    except Exception:
        # TODO(synk): Buffered(3) input pipelining unavailable on this build; retry 2-deep.
        _TRIPLE_BUFFER_INPUTS = False
        out13 = jax.block_until_ready(mix13(t13))
    ref13 = scalar_mix_ref(mix13.scalar_parameters, mix13.gamma, t13)
    assert out13.dtype == jnp.bfloat16
    assert jnp.allclose(out13.astype(jnp.float32), ref13, atol=3e-2, rtol=3e-2), \
        "mismatch (K=13 bf16)"

    print("KERNEL_OK")
</pallas_src>

<mosaic_0001>
module attributes {stable_mosaic.version = 11 : i64} {
  func.func @_affine_mix_kernel(%arg0: i32, %arg1: memref<5xf32, #tpu.memory_space<smem>>, %arg2: memref<1x512xf32, #tpu.memory_space<vmem>>, %arg3: memref<1x512xf32, #tpu.memory_space<vmem>>, %arg4: memref<1x512xf32, #tpu.memory_space<vmem>>, %arg5: memref<1x512xf32, #tpu.memory_space<vmem>>, %arg6: memref<1x512xf32, #tpu.memory_space<vmem>>) attributes {dimension_semantics = [#tpu.dimension_semantics<parallel>], iteration_bounds = array<i64: 1>, scalar_prefetch = 1 : i64, scratch_operands = 0 : i64, tpu.core_type = #tpu.core_type<tc>, window_params = [{transform_indices = @transform_0, window_bounds = array<i64: 1, 512>}, {transform_indices = @transform_1, window_bounds = array<i64: 1, 512>}, {transform_indices = @transform_2, window_bounds = array<i64: 1, 512>}, {transform_indices = @transform_3, window_bounds = array<i64: 1, 512>}, {transform_indices = @transform_4, window_bounds = array<i64: 1, 512>}]} {
    %c0 = arith.constant 0 : index
    %0 = memref.load %arg1[%c0] : memref<5xf32, #tpu.memory_space<smem>>
    %c0_0 = arith.constant 0 : index
    %c0_1 = arith.constant 0 : index
    %1 = vector.load %arg2[%c0_0, %c0_1] : memref<1x512xf32, #tpu.memory_space<vmem>>, vector<1x512xf32>
    %2 = vector.broadcast %0 : f32 to vector<1x512xf32>
    %3 = arith.mulf %2, %1 : vector<1x512xf32>
    %c1 = arith.constant 1 : index
    %4 = memref.load %arg1[%c1] : memref<5xf32, #tpu.memory_space<smem>>
    %c0_2 = arith.constant 0 : index
    %c0_3 = arith.constant 0 : index
    %5 = vector.load %arg3[%c0_2, %c0_3] : memref<1x512xf32, #tpu.memory_space<vmem>>, vector<1x512xf32>
    %6 = vector.broadcast %4 : f32 to vector<1x512xf32>
    %7 = arith.mulf %6, %5 : vector<1x512xf32>
    %8 = arith.addf %3, %7 : vector<1x512xf32>
    %c2 = arith.constant 2 : index
    %9 = memref.load %arg1[%c2] : memref<5xf32, #tpu.memory_space<smem>>
    %c0_4 = arith.constant 0 : index
    %c0_5 = arith.constant 0 : index
    %10 = vector.load %arg4[%c0_4, %c0_5] : memref<1x512xf32, #tpu.memory_space<vmem>>, vector<1x512xf32>
    %11 = vector.broadcast %9 : f32 to vector<1x512xf32>
    %12 = arith.mulf %11, %10 : vector<1x512xf32>
    %13 = arith.addf %8, %12 : vector<1x512xf32>
    %c3 = arith.constant 3 : index
    %14 = memref.load %arg1[%c3] : memref<5xf32, #tpu.memory_space<smem>>
    %c0_6 = arith.constant 0 : index
    %c0_7 = arith.constant 0 : index
    %15 = vector.load %arg5[%c0_6, %c0_7] : memref<1x512xf32, #tpu.memory_space<vmem>>, vector<1x512xf32>
    %16 = vector.broadcast %14 : f32 to vector<1x512xf32>
    %17 = arith.mulf %16, %15 : vector<1x512xf32>
    %18 = arith.addf %13, %17 : vector<1x512xf32>
    %c4 = arith.constant 4 : index
    %19 = memref.load %arg1[%c4] : memref<5xf32, #tpu.memory_space<smem>>
    %20 = vector.broadcast %19 : f32 to vector<1x512xf32>
    %21 = arith.addf %18, %20 : vector<1x512xf32>
    %c0_8 = arith.constant 0 : index
    %c0_9 = arith.constant 0 : index
    %22 = vector.load %arg6[%c0_8, %c0_9] : memref<1x512xf32, #tpu.memory_space<vmem>>, vector<1x512xf32>
    tpu.vector_store %arg6[%c0_8, %c0_9], %21 {strides = array<i32>} : memref<1x512xf32, #tpu.memory_space<vmem>>, vector<1x512xf32>,
    return
  }
  func.func @transform_0(%arg0: i32, %arg1: memref<5xf32, #tpu.memory_space<smem>>) -> (i32, i32) {
    %c0_i32 = arith.constant 0 : i32
    %c0_i32_0 = arith.constant 0 : i32
    return %arg0, %c0_i32 : i32, i32
  }
  func.func @transform_1(%arg0: i32, %arg1: memref<5xf32, #tpu.memory_space<smem>>) -> (i32, i32) {
    %c0_i32 = arith.constant 0 : i32
    %c0_i32_0 = arith.constant 0 : i32
    return %arg0, %c0_i32 : i32, i32
  }
  func.func @transform_2(%arg0: i32, %arg1: memref<5xf32, #tpu.memory_space<smem>>) -> (i32, i32) {
    %c0_i32 = arith.constant 0 : i32
    %c0_i32_0 = arith.constant 0 : i32
    return %arg0, %c0_i32 : i32, i32
  }
  func.func @transform_3(%arg0: i32, %arg1: memref<5xf32, #tpu.memory_space<smem>>) -> (i32, i32) {
    %c0_i32 = arith.constant 0 : i32
    %c0_i32_0 = arith.constant 0 : i32
    return %arg0, %c0_i32 : i32, i32
  }
  func.func @transform_4(%arg0: i32, %arg1: memref<5xf32, #tpu.memory_space<smem>>) -> (i32, i32) {
    %c0_i32 = arith.constant 0 : i32
    %c0_i32_0 = arith.constant 0 : i32
    return %arg0, %c0_i32 : i32, i32
  }
}

</mosaic_0001>

<llo_original>
// kernel: tpu_custom_call.1
$region0: #{tpu_custom_call.1}
  #allocation0 [shape = 'u32[]', space=smem, size = 0x4, offset = 0x4, fixed_abs, tag = 'smem constant byte address 0x4 - core index']
  #allocation1 [shape = 'u32[144,128]{1,0:T(1,128)}', space=vmem, size = 0x12000, scoped, tag = 'internal scratch']
  #allocation2 [shape = 's32[1]{0}', space=sflag, size = 0x4, scoped, tag = 'scoped memory for tpu_custom_call.1']
  #allocation3 [shape = 'u8[512]{0}', space=smem, size = 0x200, scoped, tag = 'prefetched SMEM operand 0']
  %s0 = inlined_call_operand.hbm [shape: f32[5], index: 0, kind: input, shape index: {}]
  %s1 = inlined_call_operand.hbm [shape: f32[1,512], index: 1, kind: input, shape index: {}]
  %s2 = inlined_call_operand.vmem [shape: f32[1,512], index: 2, kind: input, shape index: {}]
  %s3 = inlined_call_operand.vmem [shape: f32[1,512], index: 3, kind: input, shape index: {}]
  %s4 = inlined_call_operand.vmem [shape: f32[1,512], index: 4, kind: input, shape index: {}]
  %s5 = inlined_call_operand.hbm [shape: f32[1,512], index: 5, kind: output, shape index: {}]
  %s6 = sld [smem:[#allocation0]]
  $region30: #{tpu_custom_call.1} parent=0
    _
  %s8 = ssub.s32 1, %s6
  %s9 = scalar_select 0, %s8, %s6
  %11 = dma.hbm_to_smem %s0, 16, [#allocation3], [#allocation2]
  %12 = dma.done [#allocation2], 16
  %13 = sfence
  $region1: #{tpu_custom_call.1} parent=0
    #allocation4 [shape = 'u8[2048]{0}', space=vmem, size = 0x800, scoped, tag = 'input window, operand 1, single buffered']
    #allocation5 [shape = 's32[1]{0}', space=sflag, size = 0x4, scoped, tag = 'scoped memory for tpu_custom_call.1']
    #allocation6 [shape = 's32[1]{0}', space=sflag, size = 0x4, scoped, tag = 'scoped memory for tpu_custom_call.1']
    #allocation7 [shape = 'u8[2048]{0}', space=vmem, size = 0x800, scoped, tag = 'output window, operand 0, single buffered']
    %14 = vsyncpa [#allocation5], 0
    %15 = vsyncpa [#allocation6], 0
    // Predicated region
    $region2: #{tpu_custom_call.1} parent=1 // pred_check
      _
    $region3: #{tpu_custom_call.1} parent=1 // pred_check_branch
      %17 = sbr.rel (0) target = $region5
    $region4: #{tpu_custom_call.1} parent=1 // pred_region
      %s19 = ssub.s32 64, 64
      %20 = vsyncadd [#allocation5], %s19
      %s22 = sshll.u32 [#allocation4], 4
      %s23 = int_to_ptr.vmem [resolvable:$true] %s22
      %25 = dma.hbm_to_vmem [thread:$0]  %s1, 64, %s23, [#allocation5]
    $region5: #{tpu_custom_call.1} parent=1 // pred_fallthru
      _
    // Predicated region
    $region6: #{tpu_custom_call.1} parent=1 // pred_check
      _
    $region7: #{tpu_custom_call.1} parent=1 // pred_check_branch
      %27 = sbr.rel (0) target = $region9
    $region8: #{tpu_custom_call.1} parent=1 // pred_region
      _
    $region9: #{tpu_custom_call.1} parent=1 // pred_fallthru
      _
    // Predicated region
    $region10: #{tpu_custom_call.1} parent=1 // pred_check
      _
    $region11: #{tpu_custom_call.1} parent=1 // pred_check_branch
      %29 = sbr.rel (0) target = $region13
    $region12: #{tpu_custom_call.1} parent=1 // pred_region
      _
    $region13: #{tpu_custom_call.1} parent=1 // pred_fallthru
      _
    // Predicated region
    $region14: #{tpu_custom_call.1} parent=1 // pred_check
      _
    $region15: #{tpu_custom_call.1} parent=1 // pred_check_branch
      %31 = sbr.rel (0) target = $region17
    $region16: #{tpu_custom_call.1} parent=1 // pred_region
      _
    $region17: #{tpu_custom_call.1} parent=1 // pred_fallthru
      _
    // Predicated region
    $region18: #{tpu_custom_call.1} parent=1 // pred_check
      _
    $region19: #{tpu_custom_call.1} parent=1 // pred_check_branch
      %33 = sbr.rel (0) target = $region21
    $region20: #{tpu_custom_call.1} parent=1 // pred_region
      %34 = dma.done [#allocation5], 64
    $region21: #{tpu_custom_call.1} parent=1 // pred_fallthru
      _
    %s35 = sld [smem:[#allocation3]]
    %v36 = vld [vmem:[#allocation4] sm:$0xf]
    %v37 = vstv %s35
    %v38 = vmul.f32 %v37, %v36
    %s39 = sld [smem:[#allocation3 + $0x1]]
    %v40 = vld [vmem:[%s2] sm:$0xf]
    %v41 = vstv %s39
    %v42 = vmul.f32 %v41, %v40
    %v43 = vadd.f32 %v38, %v42
    %s44 = sld [smem:[#allocation3 + $0x2]]
    %v45 = vld [vmem:[%s3] sm:$0xf]
    %v46 = vstv %s44
    %v47 = vmul.f32 %v46, %v45
    %v48 = vadd.f32 %v43, %v47
    %s49 = sld [smem:[#allocation3 + $0x3]]
    %v50 = vld [vmem:[%s4] sm:$0xf]
    %v51 = vstv %s49
    %v52 = vmul.f32 %v51, %v50
    %v53 = vadd.f32 %v48, %v52
    %s54 = sld [smem:[#allocation3 + $0x4]]
    %v55 = vstv %s54
    %v56 = vadd.f32 %v53, %v55
    %v57 = vlaneseq
    %vm58 = vcmp.ge.s32.totalorder %v57, 0
    %vm59 = vcmp.lt.s32.totalorder %v57, 512
    %vm60 = vmand %vm58, %vm59
    %61 = vst.msk [vmem:[#allocation7] sm:$0xf] %vm60, %v56
    // Predicated region
    $region22: #{tpu_custom_call.1} parent=1 // pred_check
      _
    $region23: #{tpu_custom_call.1} parent=1 // pred_check_branch
      %63 = sbr.rel (0) target = $region25
    $region24: #{tpu_custom_call.1} parent=1 // pred_region
      %s65 = ssub.s32 64, 64
      %66 = vsyncadd [#allocation6], %s65
      %s68 = sshll.u32 [#allocation7], 4
      %s69 = int_to_ptr.vmem [resolvable:$true] %s68
      %71 = dma.vmem_to_hbm [thread:$0]  %s69, 64, %s5, [#allocation6]
    $region25: #{tpu_custom_call.1} parent=1 // pred_fallthru
      _
    // Predicated region
    $region26: #{tpu_custom_call.1} parent=1 // pred_check
      _
    $region27: #{tpu_custom_call.1} parent=1 // pred_check_branch
      %73 = sbr.rel (0) target = $region29
    $region28: #{tpu_custom_call.1} parent=1 // pred_region
      %74 = dma.done [#allocation6], 64
    $region29: #{tpu_custom_call.1} parent=1 // pred_fallthru
      _
    %75 = vsyncpa [#allocation5], 1
    %76 = vsyncpa [#allocation6], 1

</llo_original>
